<compile_context>
chip_gen: v7x
topology: tpu7x:2x2x1
jax: 0.10.0
libtpu: 0.0.40
codegen_flags: <defaults>
</compile_context>

<pallas_src>
import jax
import jax.numpy as jnp
from jax.experimental import pallas as pl
from jax.experimental.pallas import tpu as pltpu


def actor_kernel(x_ref, w1_ref, b1_ref, w2_ref, b2_ref, out_ref):
    # Feature-major tile: x_ref is (9, TB) f32 with the batch on the lane axis.
    x = x_ref[...].astype(jnp.bfloat16)

    # fc: (128, 9) @ (9, TB) -> (128, TB); bf16 MXU inputs, f32 accumulation.
    h = jnp.dot(w1_ref[...], x, preferred_element_type=jnp.float32) + b1_ref[...]
    h = jnp.maximum(h, 0.0)  # ReLU

    # policy head: (9, 128) @ (128, TB) -> (9, TB).
    logits = jnp.dot(w2_ref[...], h.astype(jnp.bfloat16),
                     preferred_element_type=jnp.float32) + b2_ref[...]

    # Numerically-stable softmax over the 9 feature sublanes (axis 0).
    m = jnp.max(logits, axis=0, keepdims=True)
    e = jnp.exp(logits - m)
    denom = jnp.sum(e, axis=0, keepdims=True)
    # Full-precision EUP reciprocal: every column sums to 1 to f32 rounding.
    out_ref[...] = (e * pl.reciprocal(denom, approx=False)).astype(out_ref.dtype)


def actor_forward_t(x_t, w1, b1, w2, b2, *, block_b=8192, core_parallel=False):
    """Feature-major fast path.

    x_t: (9, B) f32 board states (batch on the last/lane axis).
    w1: (128, 9), b1: (128,), w2: (9, 128), b2: (9,) -- PyTorch nn.Linear layouts.
    Returns the policy as (9, B) f32.
    """
    f_in, B = x_t.shape
    assert f_in == 9 and B >= 1

    # Hoist the bf16 weight casts out of the kernel (weights stay VMEM-resident across grid).
    w1 = w1.astype(jnp.bfloat16)
    w2 = w2.astype(jnp.bfloat16)
    b1 = b1.reshape(128, 1).astype(jnp.float32)
    b2 = b2.reshape(9, 1).astype(jnp.float32)

    if B <= block_b:
        tb, b_pad = B, B  # single tile; lane extent == full array dim (tiling rule satisfied)
    else:
        tb = max((min(block_b, B) // 128) * 128, 128)
        b_pad = pl.cdiv(B, tb) * tb
    if b_pad != B:  # pad only the ragged multi-tile tail (zero cols -> never read back)
        x_t = jnp.pad(x_t, ((0, 0), (0, b_pad - B)))

    grid = (b_pad // tb,)
    batch_sem = pltpu.CORE_PARALLEL if core_parallel else pltpu.PARALLEL

    out = pl.pallas_call(
        actor_kernel,
        out_shape=jax.ShapeDtypeStruct((9, b_pad), jnp.float32),
        grid_spec=pltpu.PrefetchScalarGridSpec(
            num_scalar_prefetch=0,
            grid=grid,
            in_specs=[
                pl.BlockSpec((9, tb), lambda i: (0, i)),    # x tile (pipelined, lane-dense)
                pl.BlockSpec((128, 9), lambda i: (0, 0)),   # W1 resident in VMEM (bf16)
                pl.BlockSpec((128, 1), lambda i: (0, 0)),   # b1 resident (f32)
                pl.BlockSpec((9, 128), lambda i: (0, 0)),   # W2 resident (bf16)
                pl.BlockSpec((9, 1), lambda i: (0, 0)),     # b2 resident (f32)
            ],
            out_specs=pl.BlockSpec((9, tb), lambda i: (0, i)),  # lane-dense output slab
        ),
        compiler_params=pltpu.CompilerParams(
            dimension_semantics=(batch_sem,),
        ),
    )(x_t, w1, b1, w2, b2)

    return out[:, :B] if b_pad != B else out


def actor_forward(x, w1, b1, w2, b2, *, block_b=8192, core_parallel=False):
    """PyTorch-layout entry: x (B, 9) -> policy (B, 9).

    The transposes are wrapper-side layout plumbing (36 B/row); a feature-major caller
    should use actor_forward_t directly and skip them.
    """
    policy_t = actor_forward_t(x.T, w1, b1, w2, b2,
                               block_b=block_b, core_parallel=core_parallel)
    return policy_t.T


def init_params(key):
    # PyTorch nn.Linear default init: U(-1/sqrt(fan_in), 1/sqrt(fan_in)); weight is (out, in).
    k1, k2, k3, k4 = jax.random.split(key, 4)
    bound1 = 1.0 / jnp.sqrt(9.0)
    bound2 = 1.0 / jnp.sqrt(128.0)
    w1 = jax.random.uniform(k1, (128, 9), jnp.float32, -bound1, bound1)
    b1 = jax.random.uniform(k2, (128,), jnp.float32, -bound1, bound1)
    w2 = jax.random.uniform(k3, (9, 128), jnp.float32, -bound2, bound2)
    b2 = jax.random.uniform(k4, (9,), jnp.float32, -bound2, bound2)
    return w1, b1, w2, b2


def reference_forward(x, w1, b1, w2, b2):
    h = jnp.maximum(x @ w1.T + b1, 0.0)
    return jax.nn.softmax(h @ w2.T + b2, axis=-1)


if __name__ == "__main__":
    key = jax.random.PRNGKey(0)
    k_params, k_x1, k_x2 = jax.random.split(key, 3)
    w1, b1, w2, b2 = init_params(k_params)

    # Small batch of tic-tac-toe board states: single tile, grid=(1,), no padding.
    x_small = jax.random.uniform(k_x1, (8, 9), jnp.float32, -1.0, 1.0)
    policy_small = actor_forward(x_small, w1, b1, w2, b2)
    jax.block_until_ready(policy_small)

    ref_small = reference_forward(x_small, w1, b1, w2, b2)
    assert policy_small.shape == (8, 9)
    # bf16 MXU inputs => relaxed tolerance vs. the f32 reference.
    assert jnp.allclose(policy_small, ref_small, atol=2e-2, rtol=2e-2)
    # Exact (non-approx) reciprocal => rows sum to 1 to f32 rounding.
    assert jnp.allclose(jnp.sum(policy_small, axis=-1), 1.0, atol=1e-3)

    # Multi-tile path with a ragged tail: B=300, tile 128 -> grid=(3,), padded to 384.
    x_big = jax.random.uniform(k_x2, (300, 9), jnp.float32, -1.0, 1.0)
    policy_big = actor_forward(x_big, w1, b1, w2, b2, block_b=128)
    jax.block_until_ready(policy_big)

    ref_big = reference_forward(x_big, w1, b1, w2, b2)
    assert policy_big.shape == (300, 9)
    assert jnp.allclose(policy_big, ref_big, atol=2e-2, rtol=2e-2)
    assert jnp.allclose(jnp.sum(policy_big, axis=-1), 1.0, atol=1e-3)

    print("KERNEL_OK")
</pallas_src>

<mosaic_0001>
module attributes {stable_mosaic.version = 11 : i64} {
  func.func @actor_kernel(%arg0: i32, %arg1: memref<9x8xf32, #tpu.memory_space<vmem>>, %arg2: memref<128x9xbf16, #tpu.memory_space<vmem>>, %arg3: memref<128x1xf32, #tpu.memory_space<vmem>>, %arg4: memref<9x128xbf16, #tpu.memory_space<vmem>>, %arg5: memref<9x1xf32, #tpu.memory_space<vmem>>, %arg6: memref<9x8xf32, #tpu.memory_space<vmem>>) attributes {dimension_semantics = [#tpu.dimension_semantics<parallel>], iteration_bounds = array<i64: 1>, scalar_prefetch = 0 : i64, scratch_operands = 0 : i64, tpu.core_type = #tpu.core_type<tc>, window_params = [{transform_indices = @transform_0, window_bounds = array<i64: 9, 8>}, {pipeline_mode = #tpu.pipeline_mode<synchronous>, transform_indices = @transform_1, window_bounds = array<i64: 128, 9>}, {pipeline_mode = #tpu.pipeline_mode<synchronous>, transform_indices = @transform_2, window_bounds = array<i64: 128, 1>}, {pipeline_mode = #tpu.pipeline_mode<synchronous>, transform_indices = @transform_3, window_bounds = array<i64: 9, 128>}, {pipeline_mode = #tpu.pipeline_mode<synchronous>, transform_indices = @transform_4, window_bounds = array<i64: 9, 1>}, {transform_indices = @transform_5, window_bounds = array<i64: 9, 8>}]} {
    %c0 = arith.constant 0 : index
    %c0_0 = arith.constant 0 : index
    %0 = vector.load %arg1[%c0, %c0_0] : memref<9x8xf32, #tpu.memory_space<vmem>>, vector<9x8xf32>
    %1 = arith.truncf %0 : vector<9x8xf32> to vector<9x8xbf16>
    %c0_1 = arith.constant 0 : index
    %c0_2 = arith.constant 0 : index
    %2 = vector.load %arg2[%c0_1, %c0_2] : memref<128x9xbf16, #tpu.memory_space<vmem>>, vector<128x9xbf16>
    %cst = arith.constant dense<0.000000e+00> : vector<128x8xf32>
    %3 = tpu.matmul %2, %1, %cst {dimension_numbers = #tpu.dot_dimension_numbers<[1], [0], [0], [1], [0, 0, 1, 1], [], []>} : vector<128x9xbf16>, vector<9x8xbf16>, vector<128x8xf32> -> vector<128x8xf32>
    %c0_3 = arith.constant 0 : index
    %c0_4 = arith.constant 0 : index
    %4 = vector.load %arg3[%c0_3, %c0_4] : memref<128x1xf32, #tpu.memory_space<vmem>>, vector<128x1xf32>
    %5 = vector.broadcast %4 : vector<128x1xf32> to vector<128x8xf32>
    %6 = arith.addf %3, %5 : vector<128x8xf32>
    %cst_5 = arith.constant 0.000000e+00 : f32
    %7 = vector.broadcast %cst_5 : f32 to vector<128x8xf32>
    %8 = arith.maximumf %6, %7 : vector<128x8xf32>
    %c0_6 = arith.constant 0 : index
    %c0_7 = arith.constant 0 : index
    %9 = vector.load %arg4[%c0_6, %c0_7] : memref<9x128xbf16, #tpu.memory_space<vmem>>, vector<9x128xbf16>
    %10 = arith.truncf %8 : vector<128x8xf32> to vector<128x8xbf16>
    %cst_8 = arith.constant dense<0.000000e+00> : vector<9x8xf32>
    %11 = tpu.matmul %9, %10, %cst_8 {dimension_numbers = #tpu.dot_dimension_numbers<[1], [0], [0], [1], [0, 0, 1, 1], [], []>} : vector<9x128xbf16>, vector<128x8xbf16>, vector<9x8xf32> -> vector<9x8xf32>
    %c0_9 = arith.constant 0 : index
    %c0_10 = arith.constant 0 : index
    %12 = vector.load %arg5[%c0_9, %c0_10] : memref<9x1xf32, #tpu.memory_space<vmem>>, vector<9x1xf32>
    %13 = vector.broadcast %12 : vector<9x1xf32> to vector<9x8xf32>
    %14 = arith.addf %11, %13 : vector<9x8xf32>
    %cst_11 = arith.constant dense<0xFF800000> : vector<8xf32>
    %15 = vector.multi_reduction <maximumf>, %14, %cst_11 [0] : vector<9x8xf32> to vector<8xf32>
    %16 = vector.shape_cast %15 : vector<8xf32> to vector<1x8xf32>
    %17 = vector.broadcast %16 : vector<1x8xf32> to vector<9x8xf32>
    %18 = arith.subf %14, %17 : vector<9x8xf32>
    %19 = math.exp %18 : vector<9x8xf32>
    %cst_12 = arith.constant dense<0.000000e+00> : vector<8xf32>
    %20 = vector.multi_reduction <add>, %19, %cst_12 [0] : vector<9x8xf32> to vector<8xf32>
    %21 = vector.shape_cast %20 : vector<8xf32> to vector<1x8xf32>
    %22 = tpu.reciprocal %21 : vector<1x8xf32> -> vector<1x8xf32>
    %23 = vector.broadcast %22 : vector<1x8xf32> to vector<9x8xf32>
    %24 = arith.mulf %19, %23 : vector<9x8xf32>
    %c0_13 = arith.constant 0 : index
    %c0_14 = arith.constant 0 : index
    %25 = vector.load %arg6[%c0_13, %c0_14] : memref<9x8xf32, #tpu.memory_space<vmem>>, vector<9x8xf32>
    tpu.vector_store %arg6[%c0_13, %c0_14], %24 {strides = array<i32>} : memref<9x8xf32, #tpu.memory_space<vmem>>, vector<9x8xf32>,
    return
  }
  func.func @transform_0(%arg0: i32) -> (i32, i32) {
    %c0_i32 = arith.constant 0 : i32
    %c0_i32_0 = arith.constant 0 : i32
    return %c0_i32, %arg0 : i32, i32
  }
  func.func @transform_1(%arg0: i32) -> (i32, i32) {
    %c0_i32 = arith.constant 0 : i32
    %c0_i32_0 = arith.constant 0 : i32
    %c0_i32_1 = arith.constant 0 : i32
    return %c0_i32, %c0_i32_0 : i32, i32
  }
  func.func @transform_2(%arg0: i32) -> (i32, i32) {
    %c0_i32 = arith.constant 0 : i32
    %c0_i32_0 = arith.constant 0 : i32
    %c0_i32_1 = arith.constant 0 : i32
    return %c0_i32, %c0_i32_0 : i32, i32
  }
  func.func @transform_3(%arg0: i32) -> (i32, i32) {
    %c0_i32 = arith.constant 0 : i32
    %c0_i32_0 = arith.constant 0 : i32
    %c0_i32_1 = arith.constant 0 : i32
    return %c0_i32, %c0_i32_0 : i32, i32
  }
  func.func @transform_4(%arg0: i32) -> (i32, i32) {
    %c0_i32 = arith.constant 0 : i32
    %c0_i32_0 = arith.constant 0 : i32
    %c0_i32_1 = arith.constant 0 : i32
    return %c0_i32, %c0_i32_0 : i32, i32
  }
  func.func @transform_5(%arg0: i32) -> (i32, i32) {
    %c0_i32 = arith.constant 0 : i32
    %c0_i32_0 = arith.constant 0 : i32
    return %c0_i32, %arg0 : i32, i32
  }
}

</mosaic_0001>

<llo_original>
// kernel: tpu_custom_call.1
$region0: #{tpu_custom_call.1}
  #allocation0 [shape = 'u32[]', space=smem, size = 0x4, offset = 0x4, fixed_abs, tag = 'smem constant byte address 0x4 - core index']
  #allocation1 [shape = 'u32[144,128]{1,0:T(1,128)}', space=vmem, size = 0x12000, scoped, tag = 'internal scratch']
  %s0 = inlined_call_operand.vmem [shape: f32[9,8], index: 0, kind: input, shape index: {}]
  %s1 = inlined_call_operand.vmem [shape: bf16[128,9], index: 1, kind: input, shape index: {}]
  %s2 = inlined_call_operand.vmem [shape: f32[128,1], index: 2, kind: input, shape index: {}]
  %s3 = inlined_call_operand.vmem [shape: bf16[9,128], index: 3, kind: input, shape index: {}]
  %s4 = inlined_call_operand.vmem [shape: f32[9,1], index: 4, kind: input, shape index: {}]
  %s5 = inlined_call_operand.vmem [shape: f32[9,8], index: 5, kind: output, shape index: {}]
  %s6 = sld [smem:[#allocation0]]
  $region30: #{tpu_custom_call.1} parent=0
    _
  %s8 = ssub.s32 1, %s6
  %s9 = scalar_select 0, %s8, %s6
  // Predicated region
  $region2: #{tpu_custom_call.1} parent=0 // pred_check
    _
  $region3: #{tpu_custom_call.1} parent=0 // pred_check_branch
    %11 = sbr.rel (0) target = $region5
  $region4: #{tpu_custom_call.1} parent=0 // pred_region
    _
  $region5: #{tpu_custom_call.1} parent=0 // pred_fallthru
    _
  // Predicated region
  $region6: #{tpu_custom_call.1} parent=0 // pred_check
    _
  $region7: #{tpu_custom_call.1} parent=0 // pred_check_branch
    %13 = sbr.rel (0) target = $region9
  $region8: #{tpu_custom_call.1} parent=0 // pred_region
    _
  $region9: #{tpu_custom_call.1} parent=0 // pred_fallthru
    _
  // Predicated region
  $region10: #{tpu_custom_call.1} parent=0 // pred_check
    _
  $region11: #{tpu_custom_call.1} parent=0 // pred_check_branch
    %15 = sbr.rel (0) target = $region13
  $region12: #{tpu_custom_call.1} parent=0 // pred_region
    _
  $region13: #{tpu_custom_call.1} parent=0 // pred_fallthru
    _
  // Predicated region
  $region14: #{tpu_custom_call.1} parent=0 // pred_check
    _
  $region15: #{tpu_custom_call.1} parent=0 // pred_check_branch
    %17 = sbr.rel (0) target = $region17
  $region16: #{tpu_custom_call.1} parent=0 // pred_region
    _
  $region17: #{tpu_custom_call.1} parent=0 // pred_fallthru
    _
  // Predicated region
  $region18: #{tpu_custom_call.1} parent=0 // pred_check
    _
  $region19: #{tpu_custom_call.1} parent=0 // pred_check_branch
    %19 = sbr.rel (0) target = $region21
  $region20: #{tpu_custom_call.1} parent=0 // pred_region
    _
  $region21: #{tpu_custom_call.1} parent=0 // pred_fallthru
    _
  %v21 = vld [vmem:[%s0] sm:$0xff]
  %v22 = vld [vmem:[%s0 + $0x8] sm:$0x1]
  %v23 = vpack.c.bf16 %v22, %v21
  %v24 = vld [vmem:[%s1] sm:$0xf]
  %v25 = vld [vmem:[%s1 + $0x4] sm:$0xf]
  %v26 = vld [vmem:[%s1 + $0x8] sm:$0xf]
  %v27 = vld [vmem:[%s1 + $0xc] sm:$0xf]
  %v28 = vld [vmem:[%s1 + $0x10] sm:$0xf]
  %v29 = vld [vmem:[%s1 + $0x14] sm:$0xf]
  %v30 = vld [vmem:[%s1 + $0x18] sm:$0xf]
  %v31 = vld [vmem:[%s1 + $0x1c] sm:$0xf]
  %v32 = vld [vmem:[%s1 + $0x20] sm:$0xf]
  %v33 = vld [vmem:[%s1 + $0x24] sm:$0xf]
  %v34 = vld [vmem:[%s1 + $0x28] sm:$0xf]
  %v35 = vld [vmem:[%s1 + $0x2c] sm:$0xf]
  %v36 = vld [vmem:[%s1 + $0x30] sm:$0xf]
  %v37 = vld [vmem:[%s1 + $0x34] sm:$0xf]
  %v38 = vld [vmem:[%s1 + $0x38] sm:$0xf]
  %v39 = vld [vmem:[%s1 + $0x3c] sm:$0xf]
  %v40 = vld [vmem:[%s2] sm:$0xff]
  %v41 = vld [vmem:[%s2 + $0x8] sm:$0xff]
  %v42 = vld [vmem:[%s2 + $0x10] sm:$0xff]
  %v43 = vld [vmem:[%s2 + $0x18] sm:$0xff]
  %v44 = vld [vmem:[%s2 + $0x20] sm:$0xff]
  %v45 = vld [vmem:[%s2 + $0x28] sm:$0xff]
  %v46 = vld [vmem:[%s2 + $0x30] sm:$0xff]
  %v47 = vld [vmem:[%s2 + $0x38] sm:$0xff]
  %v48 = vld [vmem:[%s2 + $0x40] sm:$0xff]
  %v49 = vld [vmem:[%s2 + $0x48] sm:$0xff]
  %v50 = vld [vmem:[%s2 + $0x50] sm:$0xff]
  %v51 = vld [vmem:[%s2 + $0x58] sm:$0xff]
  %v52 = vld [vmem:[%s2 + $0x60] sm:$0xff]
  %v53 = vld [vmem:[%s2 + $0x68] sm:$0xff]
  %v54 = vld [vmem:[%s2 + $0x70] sm:$0xff]
  %v55 = vld [vmem:[%s2 + $0x78] sm:$0xff]
  %57 = vset.pattern.permute.xlu0 0
  %58 = vperm.xlu0 %57, %v40
  %v59 = vpop.permute.xlu0 %58
  %62 = vset.pattern.permute.xlu0 0
  %63 = vperm.xlu0 %62, %v41
  %v64 = vpop.permute.xlu0 %63
  %67 = vset.pattern.permute.xlu0 0
  %68 = vperm.xlu0 %67, %v42
  %v69 = vpop.permute.xlu0 %68
  %72 = vset.pattern.permute.xlu0 0
  %73 = vperm.xlu0 %72, %v43
  %v74 = vpop.permute.xlu0 %73
  %77 = vset.pattern.permute.xlu0 0
  %78 = vperm.xlu0 %77, %v44
  %v79 = vpop.permute.xlu0 %78
  %82 = vset.pattern.permute.xlu0 0
  %83 = vperm.xlu0 %82, %v45
  %v84 = vpop.permute.xlu0 %83
  %87 = vset.pattern.permute.xlu0 0
  %88 = vperm.xlu0 %87, %v46
  %v89 = vpop.permute.xlu0 %88
  %92 = vset.pattern.permute.xlu0 0
  %93 = vperm.xlu0 %92, %v47
  %v94 = vpop.permute.xlu0 %93
  %97 = vset.pattern.permute.xlu0 0
  %98 = vperm.xlu0 %97, %v48
  %v99 = vpop.permute.xlu0 %98
  %102 = vset.pattern.permute.xlu0 0
  %103 = vperm.xlu0 %102, %v49
  %v104 = vpop.permute.xlu0 %103
  %107 = vset.pattern.permute.xlu0 0
  %108 = vperm.xlu0 %107, %v50
  %v109 = vpop.permute.xlu0 %108
  %112 = vset.pattern.permute.xlu0 0
  %113 = vperm.xlu0 %112, %v51
  %v114 = vpop.permute.xlu0 %113
  %117 = vset.pattern.permute.xlu0 0
  %118 = vperm.xlu0 %117, %v52
  %v119 = vpop.permute.xlu0 %118
  %122 = vset.pattern.permute.xlu0 0
  %123 = vperm.xlu0 %122, %v53
  %v124 = vpop.permute.xlu0 %123
  %127 = vset.pattern.permute.xlu0 0
  %128 = vperm.xlu0 %127, %v54
  %v129 = vpop.permute.xlu0 %128
  %132 = vset.pattern.permute.xlu0 0
  %133 = vperm.xlu0 %132, %v55
  %v134 = vpop.permute.xlu0 %133
  %v152 = vunpack.c.l.b16 %v24
  %v153 = vunpack.c.l.b16 %v25
  %v154 = vunpack.c.l.b16 %v26
  %v155 = vunpack.c.l.b16 %v27
  %v156 = vunpack.c.l.b16 %v28
  %v157 = vunpack.c.l.b16 %v29
  %v158 = vunpack.c.l.b16 %v30
  %v159 = vunpack.c.l.b16 %v31
  %v160 = vunpack.c.l.b16 %v32
  %v161 = vunpack.c.l.b16 %v33
  %v162 = vunpack.c.l.b16 %v34
  %v163 = vunpack.c.l.b16 %v35
  %v164 = vunpack.c.l.b16 %v36
  %v165 = vunpack.c.l.b16 %v37
  %v166 = vunpack.c.l.b16 %v38
  %v167 = vunpack.c.l.b16 %v39
  %v168 = vpack.c.b16 %v153, %v152
  %v169 = vpack.c.b16 %v155, %v154
  %v170 = vpack.c.b16 %v157, %v156
  %v171 = vpack.c.b16 %v159, %v158
  %v172 = vpack.c.b16 %v161, %v160
  %v173 = vpack.c.b16 %v163, %v162
  %v174 = vpack.c.b16 %v165, %v164
  %v175 = vpack.c.b16 %v167, %v166
  %vm176 = vcmask 72704
  %v178 = vsel %vm176, %v168, 0
  %v181 = vsel %vm176, %v169, 0
  %v184 = vsel %vm176, %v170, 0
  %v187 = vsel %vm176, %v171, 0
  %v190 = vsel %vm176, %v172, 0
  %v193 = vsel %vm176, %v173, 0
  %v196 = vsel %vm176, %v174, 0
  %v199 = vsel %vm176, %v175, 0
  %vm201 = vcmask 1043456
  %vm202 = vcmask 1044480
  %v203 = vsel %vm201, 4294967295, 65535
  %v204 = vsel %vm202, %v203, 0
  %v206 = vand.u32 %v23, %v204
  %208 = vmatprep.subr.bf16.mxu0 0
  %209 = vmatpush1.bf16.msra.mxu0 %v206
  %210 = vmatprep.subr.bf16.mxu0 0
  %211 = vmatpush1.bf16.msra.mxu0 0
  %212 = vmatprep.subr.bf16.mxu0 0
  %213 = vmatpush1.bf16.msra.mxu0 0
  %214 = vmatprep.subr.bf16.mxu0 0
  %215 = vmatpush1.bf16.msra.mxu0 0
  %216 = vmatprep.subr.bf16.mxu0 0
  %217 = vmatpush1.bf16.msra.mxu0 0
  %218 = vmatprep.subr.bf16.mxu0 0
  %219 = vmatpush1.bf16.msra.mxu0 0
  %220 = vmatprep.subr.bf16.mxu0 0
  %221 = vmatpush1.bf16.msra.mxu0 0
  %222 = vmatprep.subr.bf16.mxu0 0
  %223 = vmatpush1.bf16.msra.mxu0 0
  %224 = vmatprep.subr.bf16.mxu0 0
  %225 = vmatpush1.bf16.msra.mxu0 0
  %226 = vmatprep.subr.bf16.mxu0 0
  %227 = vmatpush1.bf16.msra.mxu0 0
  %228 = vmatprep.subr.bf16.mxu0 0
  %229 = vmatpush1.bf16.msra.mxu0 0
  %230 = vmatprep.subr.bf16.mxu0 0
  %231 = vmatpush1.bf16.msra.mxu0 0
  %232 = vmatprep.subr.bf16.mxu0 0
  %233 = vmatpush1.bf16.msra.mxu0 0
  %234 = vmatprep.subr.bf16.mxu0 0
  %235 = vmatpush1.bf16.msra.mxu0 0
  %236 = vmatprep.subr.bf16.mxu0 0
  %237 = vmatpush1.bf16.msra.mxu0 0
  %238 = vmatprep.subr.bf16.mxu0 0
  %239 = vmatpush1.bf16.msra.mxu0 0
  %240 = vmatprep.mubr.bf16.mxu0 0
  %241 = vmatmul.mubr.bf16.gmra.mrb[0].mxu0 %v178
  %v242 = vpop.f32.mrb[0].mxu0
  %v243 = vadd.f32 %v59, %v242
  %v244 = vpop.f32.mrb[0].mxu0
  %v245 = vpop.f32.mrb[0].mxu0
  %v246 = vadd.f32 %v64, %v245
  %v247 = vpop.f32.mrb[0].mxu0
  %248 = vmatprep.mubr.bf16.mxu0 0
  %249 = vmatmul.mubr.bf16.gmra.mrb[0].mxu0 %v181
  %v250 = vpop.f32.mrb[0].mxu0
  %v251 = vadd.f32 %v69, %v250
  %v252 = vpop.f32.mrb[0].mxu0
  %v253 = vpop.f32.mrb[0].mxu0
  %v254 = vadd.f32 %v74, %v253
  %v255 = vpop.f32.mrb[0].mxu0
  %256 = vmatprep.mubr.bf16.mxu0 0
  %257 = vmatmul.mubr.bf16.gmra.mrb[0].mxu0 %v184
  %v258 = vpop.f32.mrb[0].mxu0
  %v259 = vadd.f32 %v79, %v258
  %v260 = vpop.f32.mrb[0].mxu0
  %v261 = vpop.f32.mrb[0].mxu0
  %v262 = vadd.f32 %v84, %v261
  %v263 = vpop.f32.mrb[0].mxu0
  %264 = vmatprep.mubr.bf16.mxu0 0
  %265 = vmatmul.mubr.bf16.gmra.mrb[0].mxu0 %v187
  %v266 = vpop.f32.mrb[0].mxu0
  %v267 = vadd.f32 %v89, %v266
  %v268 = vpop.f32.mrb[0].mxu0
  %v269 = vpop.f32.mrb[0].mxu0
  %v270 = vadd.f32 %v94, %v269
  %v271 = vpop.f32.mrb[0].mxu0
  %272 = vmatprep.mubr.bf16.mxu0 0
  %273 = vmatmul.mubr.bf16.gmra.mrb[0].mxu0 %v190
  %v274 = vpop.f32.mrb[0].mxu0
  %v275 = vadd.f32 %v99, %v274
  %v276 = vpop.f32.mrb[0].mxu0
  %v277 = vpop.f32.mrb[0].mxu0
  %v278 = vadd.f32 %v104, %v277
  %v279 = vpop.f32.mrb[0].mxu0
  %280 = vmatprep.mubr.bf16.mxu0 0
  %281 = vmatmul.mubr.bf16.gmra.mrb[0].mxu0 %v193
  %v282 = vpop.f32.mrb[0].mxu0
  %v283 = vadd.f32 %v109, %v282
  %v284 = vpop.f32.mrb[0].mxu0
  %v285 = vpop.f32.mrb[0].mxu0
  %v286 = vadd.f32 %v114, %v285
  %v287 = vpop.f32.mrb[0].mxu0
  %288 = vmatprep.mubr.bf16.mxu0 0
  %289 = vmatmul.mubr.bf16.gmra.mrb[0].mxu0 %v196
  %v290 = vpop.f32.mrb[0].mxu0
  %v291 = vadd.f32 %v119, %v290
  %v292 = vpop.f32.mrb[0].mxu0
  %v293 = vpop.f32.mrb[0].mxu0
  %v294 = vadd.f32 %v124, %v293
  %v295 = vpop.f32.mrb[0].mxu0
  %296 = vmatprep.mubr.bf16.mxu0 0
  %297 = vmatmul.mubr.bf16.gmra.mrb[0].mxu0 %v199
  %v298 = vpop.f32.mrb[0].mxu0
  %v299 = vadd.f32 %v129, %v298
  %v300 = vpop.f32.mrb[0].mxu0
  %v301 = vpop.f32.mrb[0].mxu0
  %v302 = vadd.f32 %v134, %v301
  %v303 = vpop.f32.mrb[0].mxu0
  %304 = vdwg.mxu0
  %v305 = vmax.f32 %v243, 0.0
  %v306 = vmax.f32 %v246, 0.0
  %v307 = vmax.f32 %v251, 0.0
  %v308 = vmax.f32 %v254, 0.0
  %v309 = vmax.f32 %v259, 0.0
  %v310 = vmax.f32 %v262, 0.0
  %v311 = vmax.f32 %v267, 0.0
  %v312 = vmax.f32 %v270, 0.0
  %v313 = vmax.f32 %v275, 0.0
  %v314 = vmax.f32 %v278, 0.0
  %v315 = vmax.f32 %v283, 0.0
  %v316 = vmax.f32 %v286, 0.0
  %v317 = vmax.f32 %v291, 0.0
  %v318 = vmax.f32 %v294, 0.0
  %v319 = vmax.f32 %v299, 0.0
  %v320 = vmax.f32 %v302, 0.0
  %v321 = vld [vmem:[%s3] sm:$0xf]
  %v322 = vld [vmem:[%s3 + $0x4] sm:$0x1]
  %v323 = vpack.c.bf16 %v306, %v305
  %v324 = vpack.c.bf16 %v308, %v307
  %v325 = vpack.c.bf16 %v310, %v309
  %v326 = vpack.c.bf16 %v312, %v311
  %v327 = vpack.c.bf16 %v314, %v313
  %v328 = vpack.c.bf16 %v316, %v315
  %v329 = vpack.c.bf16 %v318, %v317
  %v330 = vpack.c.bf16 %v320, %v319
  %v331 = vld [vmem:[%s4] sm:$0xff]
  %v332 = vld [vmem:[%s4 + $0x8] sm:$0x1]
  %334 = vset.pattern.permute.xlu0 0
  %335 = vperm.xlu0 %334, %v331
  %v336 = vpop.permute.xlu0 %335
  %339 = vset.pattern.permute.xlu0 0
  %340 = vperm.xlu0 %339, %v332
  %v341 = vpop.permute.xlu0 %340
  %v345 = vunpack.c.l.b16 %v321
  %v346 = vunpack.c.l.b16 %v322
  %v347 = vpack.c.b16 %v346, %v345
  %349 = vmatprep.subr.bf16.mxu0 0
  %350 = vmatpush1.bf16.msra.mxu0 %v323
  %351 = vmatprep.subr.bf16.mxu0 0
  %352 = vmatpush1.bf16.msra.mxu0 %v324
  %353 = vmatprep.subr.bf16.mxu0 0
  %354 = vmatpush1.bf16.msra.mxu0 %v325
  %355 = vmatprep.subr.bf16.mxu0 0
  %356 = vmatpush1.bf16.msra.mxu0 %v326
  %357 = vmatprep.subr.bf16.mxu0 0
  %358 = vmatpush1.bf16.msra.mxu0 %v327
  %359 = vmatprep.subr.bf16.mxu0 0
  %360 = vmatpush1.bf16.msra.mxu0 %v328
  %361 = vmatprep.subr.bf16.mxu0 0
  %362 = vmatpush1.bf16.msra.mxu0 %v329
  %363 = vmatprep.subr.bf16.mxu0 0
  %364 = vmatpush1.bf16.msra.mxu0 %v330
  %365 = vmatprep.subr.bf16.mxu0 0
  %366 = vmatpush1.bf16.msra.mxu0 0
  %367 = vmatprep.subr.bf16.mxu0 0
  %368 = vmatpush1.bf16.msra.mxu0 0
  %369 = vmatprep.subr.bf16.mxu0 0
  %370 = vmatpush1.bf16.msra.mxu0 0
  %371 = vmatprep.subr.bf16.mxu0 0
  %372 = vmatpush1.bf16.msra.mxu0 0
  %373 = vmatprep.subr.bf16.mxu0 0
  %374 = vmatpush1.bf16.msra.mxu0 0
  %375 = vmatprep.subr.bf16.mxu0 0
  %376 = vmatpush1.bf16.msra.mxu0 0
  %377 = vmatprep.subr.bf16.mxu0 0
  %378 = vmatpush1.bf16.msra.mxu0 0
  %379 = vmatprep.subr.bf16.mxu0 0
  %380 = vmatpush1.bf16.msra.mxu0 0
  %381 = vmatprep.mubr.bf16.mxu0 0
  %382 = vmatmul.mubr.bf16.gmra.mrb[0].mxu0 %v347
  %v383 = vpop.f32.mrb[0].mxu0
  %v384 = vadd.f32 %v336, %v383
  %v385 = vpop.f32.mrb[0].mxu0
  %v386 = vpop.f32.mrb[0].mxu0
  %v387 = vadd.f32 %v341, %v386
  %v388 = vpop.f32.mrb[0].mxu0
  %389 = vdwg.mxu0
  %vm390 = vcmask 64512
  %v391 = vsel %vm390, %v384, -inf
  %vm392 = vcmask 57344
  %v393 = vsel %vm392, %v387, -inf
  %v394 = vmax.f32 %v391, %v393
  %v395 = vrot.slane %v394, 4
  %v396 = vmax.f32 %v394, %v395
  %v397 = vrot.slane %v396, 2
  %v398 = vmax.f32 %v396, %v397
  %v399 = vrot.slane %v398, 1
  %v400 = vmax.f32 %v398, %v399
  %v401 = vsub.f32 %v384, %v400
  %v402 = vsub.f32 %v387, %v400
  %v403 = vmul.f32 %v401, 1.442695
  %v404 = vpow.pop %v403
  %v405 = vmul.f32 %v402, 1.442695
  %v406 = vpow.pop %v405
  %v407 = vsel %vm390, %v404, 0.0
  %v408 = vsel %vm392, %v406, 0.0
  %v409 = vadd.f32 %v407, %v408
  %v410 = vrot.slane %v409, 4
  %v411 = vadd.f32 %v409, %v410
  %v412 = vrot.slane %v411, 2
  %v413 = vadd.f32 %v411, %v412
  %v414 = vrot.slane %v413, 1
  %v415 = vadd.f32 %v413, %v414
  %v416 = vrcp.pop %v415
  %v417 = vmul.f32 %v404, %v416
  %v418 = vmul.f32 %v406, %v416
  %419 = vst.msk [vmem:[%s5] sm:$0xff] %vm390, %v417
  %420 = vst.msk [vmem:[%s5 + $0x8] sm:$0x1] %vm392, %v418
  // Predicated region
  $region22: #{tpu_custom_call.1} parent=0 // pred_check
    _
  $region23: #{tpu_custom_call.1} parent=0 // pred_check_branch
    %422 = sbr.rel (0) target = $region25
  $region24: #{tpu_custom_call.1} parent=0 // pred_region
    _
  $region25: #{tpu_custom_call.1} parent=0 // pred_fallthru
    _
  // Predicated region
  $region26: #{tpu_custom_call.1} parent=0 // pred_check
    _
  $region27: #{tpu_custom_call.1} parent=0 // pred_check_branch
    %424 = sbr.rel (0) target = $region29
  $region28: #{tpu_custom_call.1} parent=0 // pred_region
    _
  $region29: #{tpu_custom_call.1} parent=0 // pred_fallthru
    _

</llo_original>
